<compile_context>
chip_gen: v5e
topology: v5e:2x2
jax: 0.10.0
libtpu: 0.0.40
codegen_flags: <defaults>
</compile_context>

<pallas_src>
import numpy as np
import jax
import jax.numpy as jnp
from jax.experimental import pallas as pl
from jax.experimental.pallas import tpu as pltpu


# ---------------------------------------------------------------------------
# Host-side operator construction (NumPy): separable pool / bilinear-upsample maps
# ---------------------------------------------------------------------------
def _pool_matrix(size, k):
    """Averaging matrix P (p, size) for avg_pool1d with kernel=stride=k, no padding."""
    p = size // k
    P = np.zeros((p, size), np.float32)
    for i in range(p):
        P[i, i * k:(i + 1) * k] = 1.0 / k
    return P


def _upsample_matrix(out_size, in_size):
    """Bilinear upsample matrix U (out_size, in_size), PyTorch align_corners=False."""
    U = np.zeros((out_size, in_size), np.float32)
    if in_size == 1:
        U[:, 0] = 1.0
        return U
    scale = in_size / out_size
    for h in range(out_size):
        src = max((h + 0.5) * scale - 0.5, 0.0)          # PyTorch clamps negative coords
        i0 = min(int(np.floor(src)), in_size - 1)
        i1 = min(i0 + 1, in_size - 1)
        w1 = src - i0
        U[h, i0] += 1.0 - w1
        U[h, i1] += w1
    return U


def _build_separable_maps(H, W):
    """Per-branch separable operators.

    Returns:
      mh_stack: (4, H, H)  Mh_k = Uh_k @ Ph_k  (applied on the left of the H axis)
      mwT_all:  (W, 4*W)   [Mw_1^T | ... | Mw_4^T] for right-multiplication on the W axis
    """
    mhs, mwts = [], []
    for kh, kw in [(H, W), (H // 2, W // 2), (H // 3, W // 3), (H // 6, W // 6)]:
        Ph, Pw = _pool_matrix(H, kh), _pool_matrix(W, kw)
        Uh, Uw = _upsample_matrix(H, Ph.shape[0]), _upsample_matrix(W, Pw.shape[0])
        mhs.append(Uh @ Ph)                              # (H, H)
        mwts.append((Uw @ Pw).T)                         # (W, W)
    return np.stack(mhs), np.concatenate(mwts, axis=1)


def _choose_bt(batch, cap=8):
    """Largest batch tile that divides `batch`, is <= cap, and keeps >= 2 grid steps
    when batch >= 2 (so v7x's two TensorCores can both be fed)."""
    best = 1
    for bt in range(1, min(batch, cap) + 1):
        if batch % bt == 0 and (batch == 1 or batch // bt >= 2):
            best = bt
    return best


# ---------------------------------------------------------------------------
# Pallas kernel
# ---------------------------------------------------------------------------
def _spp_kernel(x_ref, mwT_ref, aid_ref, abr_ref, bias_ref, o_ref):
    # x_ref:    (Bt, C*H, W)   f32   rows = (c, h), lanes = w
    # mwT_ref:  (W, 4*W)       f32   four W-direction pool∘upsample operators (columns)
    # aid_ref:  (O*H, C*H)     f32   kron(conv_w_identity, I_H)
    # abr_ref:  (4, O*H, C*H)  f32   kron(conv_w_branch_k, Mh_k)
    # bias_ref: (O*H, 1)       f32   bias[o] repeated per h
    # o_ref:    (Bt, O*H, W)   f32
    Bt, CH, W = x_ref.shape

    # Leading-dim merge only — the lane axis (W) is untouched, no relayout.
    xf = x_ref[...].reshape(Bt * CH, W)

    # Stage 1: all four W-direction operators in ONE MXU push; batch folded into rows.
    t_all = jnp.dot(xf, mwT_ref[...], preferred_element_type=jnp.float32)   # (Bt*CH, 4W)

    # Stage 2: per batch element, accumulate (1x1 conv ∘ H-direction operator) of each
    # branch straight into an (O*H, W) accumulator.  No VMEM scratch, no transposes.
    for b in range(Bt):                                  # static unroll; Bt <= 8
        lo, hi = b * CH, (b + 1) * CH                    # CH is a multiple of 8 -> aligned
        acc = jnp.dot(aid_ref[...], xf[lo:hi, :], preferred_element_type=jnp.float32)
        acc = acc + bias_ref[...]                        # (O*H, 1) broadcast across lanes
        for k in range(4):                               # static unroll over branches
            acc = acc + jnp.dot(abr_ref[k], t_all[lo:hi, k * W:(k + 1) * W],
                                preferred_element_type=jnp.float32)
        o_ref[b] = acc


def spp_forward(x, weight, bias):
    """x: (B, C, H, W) f32; weight: (O, 5C, 1, 1); bias: (O,). Returns (B, O, H, W) f32."""
    B, C, H, W = x.shape
    O = weight.shape[0]
    if H < 6 or W < 6:
        raise ValueError("SpatialPyramidPooling requires H >= 6 and W >= 6")

    Bt = _choose_bt(B)
    CH, OH = C * H, O * H

    # --- fixed operators (would be precomputed once at module init in a real model) ---
    mh_np, mwT_np = _build_separable_maps(H, W)          # (4,H,H), (W,4W)
    mwT_all = jnp.asarray(mwT_np, jnp.float32)

    w2d = weight.reshape(O, 5 * C).astype(jnp.float32)
    eye_h = jnp.eye(H, dtype=jnp.float32)
    mh = jnp.asarray(mh_np, jnp.float32)
    # Identity branch: conv weights ⊗ I_H  (rows (o,h), cols (c,h')).
    aid = jnp.kron(w2d[:, :C], eye_h)                                        # (OH, CH)
    # Pyramid branches: conv weights ⊗ (H-direction pool∘upsample).
    abr = jnp.stack([jnp.kron(w2d[:, (k + 1) * C:(k + 2) * C], mh[k])
                     for k in range(4)])                                      # (4, OH, CH)
    bias_oh = jnp.repeat(bias.astype(jnp.float32), H).reshape(OH, 1)          # (OH, 1)

    # Lane-layout-friendly 3-D views; these reshapes are free on the XLA side.
    x_in = x.astype(jnp.float32).reshape(B, CH, W)

    out = pl.pallas_call(
        _spp_kernel,
        out_shape=jax.ShapeDtypeStruct((B, OH, W), jnp.float32),
        grid=(B // Bt,),
        in_specs=[
            pl.BlockSpec((Bt, CH, W), lambda i: (i, 0, 0)),
            pl.BlockSpec((W, 4 * W), lambda i: (0, 0)),       # resident (constant index)
            pl.BlockSpec((OH, CH), lambda i: (0, 0)),
            pl.BlockSpec((4, OH, CH), lambda i: (0, 0, 0)),
            pl.BlockSpec((OH, 1), lambda i: (0, 0)),
        ],
        out_specs=pl.BlockSpec((Bt, OH, W), lambda i: (i, 0, 0)),
        compiler_params=pltpu.CompilerParams(dimension_semantics=("parallel",)),
    )(x_in, mwT_all, aid, abr, bias_oh)

    return out.reshape(B, O, H, W)


# ---------------------------------------------------------------------------
# Pure-JAX f32 reference (direct pooling + matrix bilinear upsample)
# ---------------------------------------------------------------------------
def ref_forward(x, weight2d, bias):
    B, C, H, W = x.shape
    feats = [x]
    for kh, kw in [(H, W), (H // 2, W // 2), (H // 3, W // 3), (H // 6, W // 6)]:
        ph, pw = H // kh, W // kw
        pooled = x[:, :, :ph * kh, :pw * kw].reshape(B, C, ph, kh, pw, kw).mean(axis=(3, 5))
        Uh = jnp.asarray(_upsample_matrix(H, ph))
        Uw = jnp.asarray(_upsample_matrix(W, pw))
        feats.append(jnp.einsum('hp,bcpq,wq->bchw', Uh, pooled, Uw))
    spp = jnp.concatenate(feats, axis=1)
    return jnp.einsum('oc,bchw->bohw', weight2d, spp) + bias[None, :, None, None]


if __name__ == "__main__":
    B, C_in, H, W = 2, 4, 16, 16
    C_out = 8

    key = jax.random.PRNGKey(0)
    kx, kw, kb = jax.random.split(key, 3)
    x = jax.random.normal(kx, (B, C_in, H, W), jnp.float32)

    # Deterministic Conv2d(5*C_in, C_out, 1) parameters (PyTorch-style uniform bound).
    fan_in = 5 * C_in
    bound = 1.0 / np.sqrt(fan_in)
    weight = jax.random.uniform(kw, (C_out, 5 * C_in, 1, 1), jnp.float32, -bound, bound)
    bias = jax.random.uniform(kb, (C_out,), jnp.float32, -bound, bound)

    out = spp_forward(x, weight, bias)
    out = jax.block_until_ready(out)

    ref = ref_forward(x, weight.reshape(C_out, 5 * C_in), bias)
    assert out.shape == (B, C_out, H, W)
    # f32 path typically agrees to ~1e-5; tolerance kept loose for MXU accumulation-order
    # / reduced-precision-matmul differences.
    assert jnp.allclose(out, ref, atol=5e-2, rtol=5e-2), "mismatch vs reference"

    print("KERNEL_OK")
</pallas_src>

<mosaic_0001>
module attributes {stable_mosaic.version = 11 : i64} {
  func.func @_spp_kernel(%arg0: i32, %arg1: memref<1x64x16xf32, #tpu.memory_space<vmem>>, %arg2: memref<16x64xf32, #tpu.memory_space<vmem>>, %arg3: memref<128x64xf32, #tpu.memory_space<vmem>>, %arg4: memref<4x128x64xf32, #tpu.memory_space<vmem>>, %arg5: memref<128x1xf32, #tpu.memory_space<vmem>>, %arg6: memref<1x128x16xf32, #tpu.memory_space<vmem>>) attributes {dimension_semantics = [#tpu.dimension_semantics<parallel>], iteration_bounds = array<i64: 2>, scalar_prefetch = 0 : i64, scratch_operands = 0 : i64, tpu.core_type = #tpu.core_type<tc>, window_params = [{transform_indices = @transform_0, window_bounds = array<i64: 1, 64, 16>}, {pipeline_mode = #tpu.pipeline_mode<synchronous>, transform_indices = @transform_1, window_bounds = array<i64: 16, 64>}, {pipeline_mode = #tpu.pipeline_mode<synchronous>, transform_indices = @transform_2, window_bounds = array<i64: 128, 64>}, {pipeline_mode = #tpu.pipeline_mode<synchronous>, transform_indices = @transform_3, window_bounds = array<i64: 4, 128, 64>}, {pipeline_mode = #tpu.pipeline_mode<synchronous>, transform_indices = @transform_4, window_bounds = array<i64: 128, 1>}, {transform_indices = @transform_5, window_bounds = array<i64: 1, 128, 16>}]} {
    %c0 = arith.constant 0 : index
    %c0_0 = arith.constant 0 : index
    %c0_1 = arith.constant 0 : index
    %0 = vector.load %arg1[%c0, %c0_0, %c0_1] : memref<1x64x16xf32, #tpu.memory_space<vmem>>, vector<1x64x16xf32>
    %1 = vector.shape_cast %0 : vector<1x64x16xf32> to vector<64x16xf32>
    %c0_2 = arith.constant 0 : index
    %c0_3 = arith.constant 0 : index
    %2 = vector.load %arg2[%c0_2, %c0_3] : memref<16x64xf32, #tpu.memory_space<vmem>>, vector<16x64xf32>
    %cst = arith.constant dense<0.000000e+00> : vector<64x64xf32>
    %3 = tpu.matmul %1, %2, %cst {dimension_numbers = #tpu.dot_dimension_numbers<[1], [0], [0], [1], [0, 0, 1, 1], [], []>} : vector<64x16xf32>, vector<16x64xf32>, vector<64x64xf32> -> vector<64x64xf32>
    %c0_4 = arith.constant 0 : index
    %c0_5 = arith.constant 0 : index
    %4 = vector.load %arg3[%c0_4, %c0_5] : memref<128x64xf32, #tpu.memory_space<vmem>>, vector<128x64xf32>
    %cst_6 = arith.constant dense<0.000000e+00> : vector<128x16xf32>
    %5 = tpu.matmul %4, %1, %cst_6 {dimension_numbers = #tpu.dot_dimension_numbers<[1], [0], [0], [1], [0, 0, 1, 1], [], []>} : vector<128x64xf32>, vector<64x16xf32>, vector<128x16xf32> -> vector<128x16xf32>
    %c0_7 = arith.constant 0 : index
    %c0_8 = arith.constant 0 : index
    %6 = vector.load %arg5[%c0_7, %c0_8] : memref<128x1xf32, #tpu.memory_space<vmem>>, vector<128x1xf32>
    %7 = vector.broadcast %6 : vector<128x1xf32> to vector<128x16xf32>
    %8 = arith.addf %5, %7 : vector<128x16xf32>
    %c0_9 = arith.constant 0 : index
    %c0_10 = arith.constant 0 : index
    %c0_11 = arith.constant 0 : index
    %9 = vector.load %arg4[%c0_9, %c0_10, %c0_11] : memref<4x128x64xf32, #tpu.memory_space<vmem>>, vector<1x128x64xf32>
    %10 = vector.shape_cast %9 : vector<1x128x64xf32> to vector<128x64xf32>
    %11 = vector.extract_strided_slice %3 {offsets = [0, 0], sizes = [64, 16], strides = [1, 1]} : vector<64x64xf32> to vector<64x16xf32>
    %cst_12 = arith.constant dense<0.000000e+00> : vector<128x16xf32>
    %12 = tpu.matmul %10, %11, %cst_12 {dimension_numbers = #tpu.dot_dimension_numbers<[1], [0], [0], [1], [0, 0, 1, 1], [], []>} : vector<128x64xf32>, vector<64x16xf32>, vector<128x16xf32> -> vector<128x16xf32>
    %13 = arith.addf %8, %12 : vector<128x16xf32>
    %c1 = arith.constant 1 : index
    %c0_13 = arith.constant 0 : index
    %c0_14 = arith.constant 0 : index
    %14 = vector.load %arg4[%c1, %c0_13, %c0_14] : memref<4x128x64xf32, #tpu.memory_space<vmem>>, vector<1x128x64xf32>
    %15 = vector.shape_cast %14 : vector<1x128x64xf32> to vector<128x64xf32>
    %16 = vector.extract_strided_slice %3 {offsets = [0, 16], sizes = [64, 16], strides = [1, 1]} : vector<64x64xf32> to vector<64x16xf32>
    %cst_15 = arith.constant dense<0.000000e+00> : vector<128x16xf32>
    %17 = tpu.matmul %15, %16, %cst_15 {dimension_numbers = #tpu.dot_dimension_numbers<[1], [0], [0], [1], [0, 0, 1, 1], [], []>} : vector<128x64xf32>, vector<64x16xf32>, vector<128x16xf32> -> vector<128x16xf32>
    %18 = arith.addf %13, %17 : vector<128x16xf32>
    %c2 = arith.constant 2 : index
    %c0_16 = arith.constant 0 : index
    %c0_17 = arith.constant 0 : index
    %19 = vector.load %arg4[%c2, %c0_16, %c0_17] : memref<4x128x64xf32, #tpu.memory_space<vmem>>, vector<1x128x64xf32>
    %20 = vector.shape_cast %19 : vector<1x128x64xf32> to vector<128x64xf32>
    %21 = vector.extract_strided_slice %3 {offsets = [0, 32], sizes = [64, 16], strides = [1, 1]} : vector<64x64xf32> to vector<64x16xf32>
    %cst_18 = arith.constant dense<0.000000e+00> : vector<128x16xf32>
    %22 = tpu.matmul %20, %21, %cst_18 {dimension_numbers = #tpu.dot_dimension_numbers<[1], [0], [0], [1], [0, 0, 1, 1], [], []>} : vector<128x64xf32>, vector<64x16xf32>, vector<128x16xf32> -> vector<128x16xf32>
    %23 = arith.addf %18, %22 : vector<128x16xf32>
    %c3 = arith.constant 3 : index
    %c0_19 = arith.constant 0 : index
    %c0_20 = arith.constant 0 : index
    %24 = vector.load %arg4[%c3, %c0_19, %c0_20] : memref<4x128x64xf32, #tpu.memory_space<vmem>>, vector<1x128x64xf32>
    %25 = vector.shape_cast %24 : vector<1x128x64xf32> to vector<128x64xf32>
    %26 = vector.extract_strided_slice %3 {offsets = [0, 48], sizes = [64, 16], strides = [1, 1]} : vector<64x64xf32> to vector<64x16xf32>
    %cst_21 = arith.constant dense<0.000000e+00> : vector<128x16xf32>
    %27 = tpu.matmul %25, %26, %cst_21 {dimension_numbers = #tpu.dot_dimension_numbers<[1], [0], [0], [1], [0, 0, 1, 1], [], []>} : vector<128x64xf32>, vector<64x16xf32>, vector<128x16xf32> -> vector<128x16xf32>
    %28 = arith.addf %23, %27 : vector<128x16xf32>
    %c0_22 = arith.constant 0 : index
    %c0_23 = arith.constant 0 : index
    %c0_24 = arith.constant 0 : index
    %29 = vector.load %arg6[%c0_22, %c0_23, %c0_24] : memref<1x128x16xf32, #tpu.memory_space<vmem>>, vector<1x128x16xf32>
    %30 = vector.shape_cast %29 : vector<1x128x16xf32> to vector<128x16xf32>
    %31 = vector.shape_cast %28 : vector<128x16xf32> to vector<1x128x16xf32>
    tpu.vector_store %arg6[%c0_22, %c0_23, %c0_24], %31 {strides = array<i32>} : memref<1x128x16xf32, #tpu.memory_space<vmem>>, vector<1x128x16xf32>,
    return
  }
  func.func @transform_0(%arg0: i32) -> (i32, i32, i32) {
    %c0_i32 = arith.constant 0 : i32
    %c0_i32_0 = arith.constant 0 : i32
    %c0_i32_1 = arith.constant 0 : i32
    return %arg0, %c0_i32, %c0_i32_0 : i32, i32, i32
  }
  func.func @transform_1(%arg0: i32) -> (i32, i32) {
    %c0_i32 = arith.constant 0 : i32
    %c0_i32_0 = arith.constant 0 : i32
    %c0_i32_1 = arith.constant 0 : i32
    return %c0_i32, %c0_i32_0 : i32, i32
  }
  func.func @transform_2(%arg0: i32) -> (i32, i32) {
    %c0_i32 = arith.constant 0 : i32
    %c0_i32_0 = arith.constant 0 : i32
    %c0_i32_1 = arith.constant 0 : i32
    return %c0_i32, %c0_i32_0 : i32, i32
  }
  func.func @transform_3(%arg0: i32) -> (i32, i32, i32) {
    %c0_i32 = arith.constant 0 : i32
    %c0_i32_0 = arith.constant 0 : i32
    %c0_i32_1 = arith.constant 0 : i32
    %c0_i32_2 = arith.constant 0 : i32
    return %c0_i32, %c0_i32_0, %c0_i32_1 : i32, i32, i32
  }
  func.func @transform_4(%arg0: i32) -> (i32, i32) {
    %c0_i32 = arith.constant 0 : i32
    %c0_i32_0 = arith.constant 0 : i32
    %c0_i32_1 = arith.constant 0 : i32
    return %c0_i32, %c0_i32_0 : i32, i32
  }
  func.func @transform_5(%arg0: i32) -> (i32, i32, i32) {
    %c0_i32 = arith.constant 0 : i32
    %c0_i32_0 = arith.constant 0 : i32
    %c0_i32_1 = arith.constant 0 : i32
    return %arg0, %c0_i32, %c0_i32_0 : i32, i32, i32
  }
}

</mosaic_0001>

<llo_original>
// kernel: tpu_custom_call.1
$region0: #{tpu_custom_call.1}
  #allocation0 [shape = 'u32[]', space=smem, size = 0x4, offset = 0x4, fixed_abs, tag = 'smem constant byte address 0x4 - core index']
  #allocation1 [shape = 'u32[72,128]{1,0:T(1,128)}', space=vmem, size = 0x9000, scoped, tag = 'internal scratch']
  %s0 = inlined_call_operand.vmem [shape: f32[2,64,16], index: 0, kind: input, shape index: {}]
  %s1 = inlined_call_operand.vmem [shape: f32[16,64], index: 1, kind: input, shape index: {}]
  %s2 = inlined_call_operand.vmem [shape: f32[128,64], index: 2, kind: input, shape index: {}]
  %s3 = inlined_call_operand.vmem [shape: f32[4,128,64], index: 3, kind: input, shape index: {}]
  %s4 = inlined_call_operand.vmem [shape: f32[128,1], index: 4, kind: input, shape index: {}]
  %s5 = inlined_call_operand.vmem [shape: f32[2,128,16], index: 5, kind: output, shape index: {}]
  %s6 = sld [smem:[#allocation0]]
  $region53: #{tpu_custom_call.1} parent=0
    _
  %s8 = ssub.s32 1, %s6
  %s9 = scalar_select 0, %s8, %s6
  loop: start=0, step=1, limit=4
  $region2: #{tpu_custom_call.1} parent=0 // loop_pre_header
    _
  $region3: #{tpu_custom_call.1} parent=0 // loop_header
    %s11 = sphi 0, %s15
    %p12 = scmp.ge.s32.totalorder %s11, 4
    %s21 = sphi 0, %s23
    %s24 = sphi 0, %s21
    %s25 = sphi 0, %s24
    %s41 = sphi 0, %s25
    %s45 = sphi 0, %s45
    %s47 = sphi 0, %s45
    %s48 = sphi 0, %s47
    %s62 = sphi 0, %s48
    %s66 = sphi 0, %s66
    %s68 = sphi 0, %s66
    %s69 = sphi 0, %s68
    %s83 = sphi 0, %s69
    %s87 = sphi 0, %s87
    %s89 = sphi 0, %s87
    %s90 = sphi 0, %s89
    %s104 = sphi 0, %s90
    %s108 = sphi 0, %s108
    %s110 = sphi 0, %s108
    %s111 = sphi 0, %s110
    %s125 = sphi 0, %s111
    %s131 = sphi 0, %s133
    %s134 = sphi 0, %s131
    %s135 = sphi 0, %s134
    %s151 = sphi 0, %s135
  $region4: #{tpu_custom_call.1} parent=0 // loop_header_branch
    %14 = sbr.rel (%p12) target = $region8
  $region5: #{tpu_custom_call.1} parent=0 // loop_body
    %s16 = ssub.s32 %s11, 1
    %s17 = ssub.s32 %s11, 2
    %s18 = sadd.s32 %s11, 1
    %s19 = ssub.s32 %s11, %s18
    %p20 = scmp.eq.s32.totalorder %s19, 0
    %s22 = sadd.s32 %s21, 1
    %s23 = scalar_select %p20, %s21, %s22
    %p26 = pneg %p20
    %p27 = scmp.eq.s32.totalorder %s11, 1
    %p28 = por %p26, %p27
    %p29 = scmp.ne.s32.totalorder %s21, %s24
    %p30 = scmp.eq.s32.totalorder %s11, 0
    %p31 = por %p29, %p30
    %p32 = scmp.ne.s32.totalorder %s21, %s24
    %p33 = scmp.eq.s32.totalorder %s16, 1
    %p34 = por %p32, %p33
    %p35 = scmp.ne.s32.totalorder %s24, %s25
    %p36 = scmp.eq.s32.totalorder %s16, 0
    %p37 = por %p35, %p36
    %p38 = scmp.ne.s32.totalorder %s24, %s25
    %p39 = scmp.eq.s32.totalorder %s17, 1
    %p40 = por %p38, %p39
    %p42 = scmp.ne.s32.totalorder %s25, %s41
    %p43 = scmp.eq.s32.totalorder %s17, 0
    %p44 = por %p42, %p43
    %s46 = sadd.s32 %s45, 1
    %p49 = scmp.eq.s32.totalorder %s11, 1
    %p50 = scmp.ne.s32.totalorder %s45, %s47
    %p51 = scmp.eq.s32.totalorder %s11, 0
    %p52 = por %p50, %p51
    %p53 = scmp.ne.s32.totalorder %s45, %s47
    %p54 = scmp.eq.s32.totalorder %s16, 1
    %p55 = por %p53, %p54
    %p56 = scmp.ne.s32.totalorder %s47, %s48
    %p57 = scmp.eq.s32.totalorder %s16, 0
    %p58 = por %p56, %p57
    %p59 = scmp.ne.s32.totalorder %s47, %s48
    %p60 = scmp.eq.s32.totalorder %s17, 1
    %p61 = por %p59, %p60
    %p63 = scmp.ne.s32.totalorder %s48, %s62
    %p64 = scmp.eq.s32.totalorder %s17, 0
    %p65 = por %p63, %p64
    %s67 = sadd.s32 %s66, 1
    %p70 = scmp.eq.s32.totalorder %s11, 1
    %p71 = scmp.ne.s32.totalorder %s66, %s68
    %p72 = scmp.eq.s32.totalorder %s11, 0
    %p73 = por %p71, %p72
    %p74 = scmp.ne.s32.totalorder %s66, %s68
    %p75 = scmp.eq.s32.totalorder %s16, 1
    %p76 = por %p74, %p75
    %p77 = scmp.ne.s32.totalorder %s68, %s69
    %p78 = scmp.eq.s32.totalorder %s16, 0
    %p79 = por %p77, %p78
    %p80 = scmp.ne.s32.totalorder %s68, %s69
    %p81 = scmp.eq.s32.totalorder %s17, 1
    %p82 = por %p80, %p81
    %p84 = scmp.ne.s32.totalorder %s69, %s83
    %p85 = scmp.eq.s32.totalorder %s17, 0
    %p86 = por %p84, %p85
    %s88 = sadd.s32 %s87, 1
    %p91 = scmp.eq.s32.totalorder %s11, 1
    %p92 = scmp.ne.s32.totalorder %s87, %s89
    %p93 = scmp.eq.s32.totalorder %s11, 0
    %p94 = por %p92, %p93
    %p95 = scmp.ne.s32.totalorder %s87, %s89
    %p96 = scmp.eq.s32.totalorder %s16, 1
    %p97 = por %p95, %p96
    %p98 = scmp.ne.s32.totalorder %s89, %s90
    %p99 = scmp.eq.s32.totalorder %s16, 0
    %p100 = por %p98, %p99
    %p101 = scmp.ne.s32.totalorder %s89, %s90
    %p102 = scmp.eq.s32.totalorder %s17, 1
    %p103 = por %p101, %p102
    %p105 = scmp.ne.s32.totalorder %s90, %s104
    %p106 = scmp.eq.s32.totalorder %s17, 0
    %p107 = por %p105, %p106
    %s109 = sadd.s32 %s108, 1
    %p112 = scmp.eq.s32.totalorder %s11, 1
    %p113 = scmp.ne.s32.totalorder %s108, %s110
    %p114 = scmp.eq.s32.totalorder %s11, 0
    %p115 = por %p113, %p114
    %p116 = scmp.ne.s32.totalorder %s108, %s110
    %p117 = scmp.eq.s32.totalorder %s16, 1
    %p118 = por %p116, %p117
    %p119 = scmp.ne.s32.totalorder %s110, %s111
    %p120 = scmp.eq.s32.totalorder %s16, 0
    %p121 = por %p119, %p120
    %p122 = scmp.ne.s32.totalorder %s110, %s111
    %p123 = scmp.eq.s32.totalorder %s17, 1
    %p124 = por %p122, %p123
    %p126 = scmp.ne.s32.totalorder %s111, %s125
    %p127 = scmp.eq.s32.totalorder %s17, 0
    %p128 = por %p126, %p127
    %s129 = ssub.s32 %s11, %s18
    %p130 = scmp.eq.s32.totalorder %s129, 0
    %s132 = sadd.s32 %s131, 1
    %s133 = scalar_select %p130, %s131, %s132
    %p136 = pneg %p130
    %p137 = scmp.eq.s32.totalorder %s11, 1
    %p138 = por %p136, %p137
    %p139 = scmp.ne.s32.totalorder %s131, %s134
    %p140 = scmp.eq.s32.totalorder %s11, 0
    %p141 = por %p139, %p140
    %p142 = scmp.ne.s32.totalorder %s131, %s134
    %p143 = scmp.eq.s32.totalorder %s16, 1
    %p144 = por %p142, %p143
    %p145 = scmp.ne.s32.totalorder %s134, %s135
    %p146 = scmp.eq.s32.totalorder %s16, 0
    %p147 = por %p145, %p146
    %p148 = scmp.ne.s32.totalorder %s134, %s135
    %p149 = scmp.eq.s32.totalorder %s17, 1
    %p150 = por %p148, %p149
    %p152 = scmp.ne.s32.totalorder %s135, %s151
    %p153 = scmp.eq.s32.totalorder %s17, 0
    %p154 = por %p152, %p153
    %p155 = scmp.le.s32.totalorder 1, %s11
    %p156 = scmp.lt.s32.totalorder %s11, 3
    %p157 = pnand %p155, %p156
    %p158 = pneg %p157
    // Predicated region
    $region9: #{tpu_custom_call.1} parent=5 // pred_check
      _
    $region10: #{tpu_custom_call.1} parent=5 // pred_check_branch
      %160 = sbr.rel (%p157) target = $region12
    $region11: #{tpu_custom_call.1} parent=5 // pred_region
      %s161 = ssub.s32 %s11, 1
      // Predicated region
      $region13: #{tpu_custom_call.1} parent=11 // pred_check
        %p162 = pneg %p58
      $region14: #{tpu_custom_call.1} parent=11 // pred_check_branch
        %164 = sbr.rel (%p162) target = $region16
      $region15: #{tpu_custom_call.1} parent=11 // pred_region
        _
      $region16: #{tpu_custom_call.1} parent=11 // pred_fallthru
        _
      // Predicated region
      $region17: #{tpu_custom_call.1} parent=11 // pred_check
        %p165 = pneg %p79
      $region18: #{tpu_custom_call.1} parent=11 // pred_check_branch
        %167 = sbr.rel (%p165) target = $region20
      $region19: #{tpu_custom_call.1} parent=11 // pred_region
        _
      $region20: #{tpu_custom_call.1} parent=11 // pred_fallthru
        _
      // Predicated region
      $region21: #{tpu_custom_call.1} parent=11 // pred_check
        %p168 = pneg %p100
      $region22: #{tpu_custom_call.1} parent=11 // pred_check_branch
        %170 = sbr.rel (%p168) target = $region24
      $region23: #{tpu_custom_call.1} parent=11 // pred_region
        _
      $region24: #{tpu_custom_call.1} parent=11 // pred_fallthru
        _
      // Predicated region
      $region25: #{tpu_custom_call.1} parent=11 // pred_check
        %p171 = pneg %p121
      $region26: #{tpu_custom_call.1} parent=11 // pred_check_branch
        %173 = sbr.rel (%p171) target = $region28
      $region27: #{tpu_custom_call.1} parent=11 // pred_region
        _
      $region28: #{tpu_custom_call.1} parent=11 // pred_fallthru
        _
    $region12: #{tpu_custom_call.1} parent=5 // pred_fallthru
      _
    %p174 = scmp.lt.s32.totalorder %s11, 2
    // Predicated region
    $region29: #{tpu_custom_call.1} parent=5 // pred_check
      %p175 = pneg %p174
    $region30: #{tpu_custom_call.1} parent=5 // pred_check_branch
      %177 = sbr.rel (%p175) target = $region32
    $region31: #{tpu_custom_call.1} parent=5 // pred_region
      // Predicated region
      $region33: #{tpu_custom_call.1} parent=31 // pred_check
        %p178 = pneg %p31
      $region34: #{tpu_custom_call.1} parent=31 // pred_check_branch
        %180 = sbr.rel (%p178) target = $region36
      $region35: #{tpu_custom_call.1} parent=31 // pred_region
        %p181 = scmp.lt.s32.totalorder %s11, 1
        %s182 = scalar_select %p181, %s11, 1
        %s183 = smul.addr %s182, 8
        %s184 = smul.addr %s183, 8
        %s185 = scalar_lea.vmem %s0, %s184
      $region36: #{tpu_custom_call.1} parent=31 // pred_fallthru
        _
    $region32: #{tpu_custom_call.1} parent=5 // pred_fallthru
      _
    %p186 = scmp.le.s32.totalorder 1, %s11
    %p187 = scmp.lt.s32.totalorder %s11, 3
    %p188 = pnand %p186, %p187
    %p189 = pneg %p188
    // Predicated region
    $region37: #{tpu_custom_call.1} parent=5 // pred_check
      _
    $region38: #{tpu_custom_call.1} parent=5 // pred_check_branch
      %191 = sbr.rel (%p188) target = $region40
    $region39: #{tpu_custom_call.1} parent=5 // pred_region
      %s192 = ssub.s32 %s11, 1
      %p193 = scmp.lt.s32.totalorder %s16, 1
      %s194 = scalar_select %p193, %s16, 1
      %s195 = smul.addr %s194, 8
      %s196 = smul.addr %s195, 8
      %s197 = scalar_lea.vmem %s0, %s196
      %p198 = pneg %p37
      %p199 = pneg %p34
      %p200 = pneg %p58
      %p201 = pneg %p55
      %p202 = pneg %p79
      %p203 = pneg %p76
      %p204 = pneg %p100
      %p205 = pneg %p97
      %p206 = pneg %p121
      %p207 = pneg %p118
      %p208 = pneg %p147
      %p209 = pneg %p144
      %p210 = scmp.lt.s32.totalorder %s16, 1
      %s211 = scalar_select %p210, %s16, 1
      %s212 = smul.addr %s211, 16
      %s213 = smul.addr %s212, 8
      %s214 = scalar_lea.vmem %s5, %s213
      %p215 = scmp.lt.s32.totalorder %s16, 1
      %s216 = scalar_select %p215, %s16, 1
      %s217 = smul.addr %s216, 8
      %s218 = smul.addr %s217, 8
      %s219 = scalar_lea.vmem %s0, %s218
      %p220 = scmp.lt.s32.totalorder %s16, 1
      %s221 = scalar_select %p220, %s16, 1
      %s222 = smul.addr %s221, 16
      %s223 = smul.addr %s222, 8
      %s224 = scalar_lea.vmem %s5, %s223
      %v225 = vld [vmem:[%s219] sm:$0xff]
      %v226 = vld [vmem:[%s219 + $0x8] sm:$0xff]
      %v227 = vld [vmem:[%s219 + $0x10] sm:$0xff]
      %v228 = vld [vmem:[%s219 + $0x18] sm:$0xff]
      %v229 = vld [vmem:[%s219 + $0x20] sm:$0xff]
      %v230 = vld [vmem:[%s219 + $0x28] sm:$0xff]
      %v231 = vld [vmem:[%s219 + $0x30] sm:$0xff]
      %v232 = vld [vmem:[%s219 + $0x38] sm:$0xff]
      %v233 = vld [vmem:[%s1] sm:$0xff]
      %v234 = vld [vmem:[%s1 + $0x8] sm:$0xff]
      %vm235 = vcmask 130048
      %v237 = vsel %vm235, %v225, 0
      %v240 = vsel %vm235, %v226, 0
      %v243 = vsel %vm235, %v227, 0
      %v246 = vsel %vm235, %v228, 0
      %v249 = vsel %vm235, %v229, 0
      %v252 = vsel %vm235, %v230, 0
      %v255 = vsel %vm235, %v231, 0
      %v258 = vsel %vm235, %v232, 0
      %260 = vmatpush.msra.mxu0 0.0
      %261 = vmatpush.msra.mxu0 0.0
      %262 = vmatpush.msra.mxu0 0.0
      %263 = vmatpush.msra.mxu0 0.0
      %264 = vmatpush.msra.mxu0 0.0
      %265 = vmatpush.msra.mxu0 0.0
      %266 = vmatpush.msra.mxu0 0.0
      %267 = vmatpush.msra.mxu0 0.0
      %268 = vmatpush.msra.mxu0 0.0
      %269 = vmatpush.msra.mxu0 0.0
      %270 = vmatpush.msra.mxu0 0.0
      %271 = vmatpush.msra.mxu0 0.0
      %272 = vmatpush.msra.mxu0 0.0
      %273 = vmatpush.msra.mxu0 0.0
      %274 = vmatpush.msra.mxu0 %v234
      %275 = vmatpush.msra.mxu0 %v233
      %276 = vmatmul.f32.gmra.mxu0 %v237
      %v277 = vpop.f32.mrf.mxu0
      %v278 = vadd.f32 0.0, %v277
      %279 = vmatmul.f32.gmra.mxu0 %v240
      %v280 = vpop.f32.mrf.mxu0
      %v281 = vadd.f32 0.0, %v280
      %282 = vmatmul.f32.gmra.mxu0 %v243
      %v283 = vpop.f32.mrf.mxu0
      %v284 = vadd.f32 0.0, %v283
      %285 = vmatmul.f32.gmra.mxu0 %v246
      %v286 = vpop.f32.mrf.mxu0
      %v287 = vadd.f32 0.0, %v286
      %288 = vmatmul.f32.gmra.mxu0 %v249
      %v289 = vpop.f32.mrf.mxu0
      %v290 = vadd.f32 0.0, %v289
      %291 = vmatmul.f32.gmra.mxu0 %v252
      %v292 = vpop.f32.mrf.mxu0
      %v293 = vadd.f32 0.0, %v292
      %294 = vmatmul.f32.gmra.mxu0 %v255
      %v295 = vpop.f32.mrf.mxu0
      %v296 = vadd.f32 0.0, %v295
      %297 = vmatmul.f32.gmra.mxu0 %v258
      %v298 = vpop.f32.mrf.mxu0
      %v299 = vadd.f32 0.0, %v298
      %300 = vdwg.mxu0
      %v301 = vld [vmem:[%s2] sm:$0xff]
      %v302 = vld [vmem:[%s2 + $0x8] sm:$0xff]
      %v303 = vld [vmem:[%s2 + $0x10] sm:$0xff]
      %v304 = vld [vmem:[%s2 + $0x18] sm:$0xff]
      %v305 = vld [vmem:[%s2 + $0x20] sm:$0xff]
      %v306 = vld [vmem:[%s2 + $0x28] sm:$0xff]
      %v307 = vld [vmem:[%s2 + $0x30] sm:$0xff]
      %v308 = vld [vmem:[%s2 + $0x38] sm:$0xff]
      %v309 = vld [vmem:[%s2 + $0x40] sm:$0xff]
      %v310 = vld [vmem:[%s2 + $0x48] sm:$0xff]
      %v311 = vld [vmem:[%s2 + $0x50] sm:$0xff]
      %v312 = vld [vmem:[%s2 + $0x58] sm:$0xff]
      %v313 = vld [vmem:[%s2 + $0x60] sm:$0xff]
      %v314 = vld [vmem:[%s2 + $0x68] sm:$0xff]
      %v315 = vld [vmem:[%s2 + $0x70] sm:$0xff]
      %v316 = vld [vmem:[%s2 + $0x78] sm:$0xff]
      %v317 = vld [vmem:[%s4] sm:$0xff]
      %v318 = vld [vmem:[%s4 + $0x8] sm:$0xff]
      %v319 = vld [vmem:[%s4 + $0x10] sm:$0xff]
      %v320 = vld [vmem:[%s4 + $0x18] sm:$0xff]
      %v321 = vld [vmem:[%s4 + $0x20] sm:$0xff]
      %v322 = vld [vmem:[%s4 + $0x28] sm:$0xff]
      %v323 = vld [vmem:[%s4 + $0x30] sm:$0xff]
      %v324 = vld [vmem:[%s4 + $0x38] sm:$0xff]
      %v325 = vld [vmem:[%s4 + $0x40] sm:$0xff]
      %v326 = vld [vmem:[%s4 + $0x48] sm:$0xff]
      %v327 = vld [vmem:[%s4 + $0x50] sm:$0xff]
      %v328 = vld [vmem:[%s4 + $0x58] sm:$0xff]
      %v329 = vld [vmem:[%s4 + $0x60] sm:$0xff]
      %v330 = vld [vmem:[%s4 + $0x68] sm:$0xff]
      %v331 = vld [vmem:[%s4 + $0x70] sm:$0xff]
      %v332 = vld [vmem:[%s4 + $0x78] sm:$0xff]
      %334 = vset.pattern.permute.xlu0 0
      %335 = vperm.xlu0 %334, %v317
      %v336 = vpop.permute.xlu0 %335
      %339 = vset.pattern.permute.xlu0 0
      %340 = vperm.xlu0 %339, %v318
      %v341 = vpop.permute.xlu0 %340
      %344 = vset.pattern.permute.xlu0 0
      %345 = vperm.xlu0 %344, %v319
      %v346 = vpop.permute.xlu0 %345
      %349 = vset.pattern.permute.xlu0 0
      %350 = vperm.xlu0 %349, %v320
      %v351 = vpop.permute.xlu0 %350
      %354 = vset.pattern.permute.xlu0 0
      %355 = vperm.xlu0 %354, %v321
      %v356 = vpop.permute.xlu0 %355
      %359 = vset.pattern.permute.xlu0 0
      %360 = vperm.xlu0 %359, %v322
      %v361 = vpop.permute.xlu0 %360
      %364 = vset.pattern.permute.xlu0 0
      %365 = vperm.xlu0 %364, %v323
      %v366 = vpop.permute.xlu0 %365
      %369 = vset.pattern.permute.xlu0 0
      %370 = vperm.xlu0 %369, %v324
      %v371 = vpop.permute.xlu0 %370
      %374 = vset.pattern.permute.xlu0 0
      %375 = vperm.xlu0 %374, %v325
      %v376 = vpop.permute.xlu0 %375
      %379 = vset.pattern.permute.xlu0 0
      %380 = vperm.xlu0 %379, %v326
      %v381 = vpop.permute.xlu0 %380
      %384 = vset.pattern.permute.xlu0 0
      %385 = vperm.xlu0 %384, %v327
      %v386 = vpop.permute.xlu0 %385
      %389 = vset.pattern.permute.xlu0 0
      %390 = vperm.xlu0 %389, %v328
      %v391 = vpop.permute.xlu0 %390
      %394 = vset.pattern.permute.xlu0 0
      %395 = vperm.xlu0 %394, %v329
      %v396 = vpop.permute.xlu0 %395
      %399 = vset.pattern.permute.xlu0 0
      %400 = vperm.xlu0 %399, %v330
      %v401 = vpop.permute.xlu0 %400
      %404 = vset.pattern.permute.xlu0 0
      %405 = vperm.xlu0 %404, %v331
      %v406 = vpop.permute.xlu0 %405
      %409 = vset.pattern.permute.xlu0 0
      %410 = vperm.xlu0 %409, %v332
      %v411 = vpop.permute.xlu0 %410
      %vm413 = vcmask 523264
      %v415 = vsel %vm413, %v301, 0
      %v418 = vsel %vm413, %v302, 0
      %v421 = vsel %vm413, %v303, 0
      %v424 = vsel %vm413, %v304, 0
      %v427 = vsel %vm413, %v305, 0
      %v430 = vsel %vm413, %v306, 0
      %v433 = vsel %vm413, %v307, 0
      %v436 = vsel %vm413, %v308, 0
      %v439 = vsel %vm413, %v309, 0
      %v442 = vsel %vm413, %v310, 0
      %v445 = vsel %vm413, %v311, 0
      %v448 = vsel %vm413, %v312, 0
      %v451 = vsel %vm413, %v313, 0
      %v454 = vsel %vm413, %v314, 0
      %v457 = vsel %vm413, %v315, 0
      %v460 = vsel %vm413, %v316, 0
      %462 = vmatpush.msra.mxu0 0.0
      %463 = vmatpush.msra.mxu0 0.0
      %464 = vmatpush.msra.mxu0 0.0
      %465 = vmatpush.msra.mxu0 0.0
      %466 = vmatpush.msra.mxu0 0.0
      %467 = vmatpush.msra.mxu0 0.0
      %468 = vmatpush.msra.mxu0 0.0
      %469 = vmatpush.msra.mxu0 0.0
      %470 = vmatpush.msra.mxu0 %v232
      %471 = vmatpush.msra.mxu0 %v231
      %472 = vmatpush.msra.mxu0 %v230
      %473 = vmatpush.msra.mxu0 %v229
      %474 = vmatpush.msra.mxu0 %v228
      %475 = vmatpush.msra.mxu0 %v227
      %476 = vmatpush.msra.mxu0 %v226
      %477 = vmatpush.msra.mxu0 %v225
      %478 = vmatmul.f32.gmra.mxu0 %v415
      %v479 = vpop.f32.mrf.mxu0
      %v480 = vadd.f32 %v336, %v479
      %481 = vmatmul.f32.gmra.mxu0 %v418
      %v482 = vpop.f32.mrf.mxu0
      %v483 = vadd.f32 %v341, %v482
      %484 = vmatmul.f32.gmra.mxu0 %v421
      %v485 = vpop.f32.mrf.mxu0
      %v486 = vadd.f32 %v346, %v485
      %487 = vmatmul.f32.gmra.mxu0 %v424
      %v488 = vpop.f32.mrf.mxu0
      %v489 = vadd.f32 %v351, %v488
      %490 = vmatmul.f32.gmra.mxu0 %v427
      %v491 = vpop.f32.mrf.mxu0
      %v492 = vadd.f32 %v356, %v491
      %493 = vmatmul.f32.gmra.mxu0 %v430
      %v494 = vpop.f32.mrf.mxu0
      %v495 = vadd.f32 %v361, %v494
      %496 = vmatmul.f32.gmra.mxu0 %v433
      %v497 = vpop.f32.mrf.mxu0
      %v498 = vadd.f32 %v366, %v497
      %499 = vmatmul.f32.gmra.mxu0 %v436
      %v500 = vpop.f32.mrf.mxu0
      %v501 = vadd.f32 %v371, %v500
      %502 = vmatmul.f32.gmra.mxu0 %v439
      %v503 = vpop.f32.mrf.mxu0
      %v504 = vadd.f32 %v376, %v503
      %505 = vmatmul.f32.gmra.mxu0 %v442
      %v506 = vpop.f32.mrf.mxu0
      %v507 = vadd.f32 %v381, %v506
      %508 = vmatmul.f32.gmra.mxu0 %v445
      %v509 = vpop.f32.mrf.mxu0
      %v510 = vadd.f32 %v386, %v509
      %511 = vmatmul.f32.gmra.mxu0 %v448
      %v512 = vpop.f32.mrf.mxu0
      %v513 = vadd.f32 %v391, %v512
      %514 = vmatmul.f32.gmra.mxu0 %v451
      %v515 = vpop.f32.mrf.mxu0
      %v516 = vadd.f32 %v396, %v515
      %517 = vmatmul.f32.gmra.mxu0 %v454
      %v518 = vpop.f32.mrf.mxu0
      %v519 = vadd.f32 %v401, %v518
      %520 = vmatmul.f32.gmra.mxu0 %v457
      %v521 = vpop.f32.mrf.mxu0
      %v522 = vadd.f32 %v406, %v521
      %523 = vmatmul.f32.gmra.mxu0 %v460
      %v524 = vpop.f32.mrf.mxu0
      %v525 = vadd.f32 %v411, %v524
      %526 = vdwg.mxu0
      %v527 = vld [vmem:[%s3] sm:$0xff]
      %v528 = vld [vmem:[%s3 + $0x8] sm:$0xff]
      %v529 = vld [vmem:[%s3 + $0x10] sm:$0xff]
      %v530 = vld [vmem:[%s3 + $0x18] sm:$0xff]
      %v531 = vld [vmem:[%s3 + $0x20] sm:$0xff]
      %v532 = vld [vmem:[%s3 + $0x28] sm:$0xff]
      %v533 = vld [vmem:[%s3 + $0x30] sm:$0xff]
      %v534 = vld [vmem:[%s3 + $0x38] sm:$0xff]
      %v535 = vld [vmem:[%s3 + $0x40] sm:$0xff]
      %v536 = vld [vmem:[%s3 + $0x48] sm:$0xff]
      %v537 = vld [vmem:[%s3 + $0x50] sm:$0xff]
      %v538 = vld [vmem:[%s3 + $0x58] sm:$0xff]
      %v539 = vld [vmem:[%s3 + $0x60] sm:$0xff]
      %v540 = vld [vmem:[%s3 + $0x68] sm:$0xff]
      %v541 = vld [vmem:[%s3 + $0x70] sm:$0xff]
      %v542 = vld [vmem:[%s3 + $0x78] sm:$0xff]
      %v544 = vsel %vm413, %v527, 0
      %v547 = vsel %vm413, %v528, 0
      %v550 = vsel %vm413, %v529, 0
      %v553 = vsel %vm413, %v530, 0
      %v556 = vsel %vm413, %v531, 0
      %v559 = vsel %vm413, %v532, 0
      %v562 = vsel %vm413, %v533, 0
      %v565 = vsel %vm413, %v534, 0
      %v568 = vsel %vm413, %v535, 0
      %v571 = vsel %vm413, %v536, 0
      %v574 = vsel %vm413, %v537, 0
      %v577 = vsel %vm413, %v538, 0
      %v580 = vsel %vm413, %v539, 0
      %v583 = vsel %vm413, %v540, 0
      %v586 = vsel %vm413, %v541, 0
      %v589 = vsel %vm413, %v542, 0
      %591 = vmatpush.msra.mxu0 0.0
      %592 = vmatpush.msra.mxu0 0.0
      %593 = vmatpush.msra.mxu0 0.0
      %594 = vmatpush.msra.mxu0 0.0
      %595 = vmatpush.msra.mxu0 0.0
      %596 = vmatpush.msra.mxu0 0.0
      %597 = vmatpush.msra.mxu0 0.0
      %598 = vmatpush.msra.mxu0 0.0
      %599 = vmatpush.msra.mxu0 %v299
      %600 = vmatpush.msra.mxu0 %v296
      %601 = vmatpush.msra.mxu0 %v293
      %602 = vmatpush.msra.mxu0 %v290
      %603 = vmatpush.msra.mxu0 %v287
      %604 = vmatpush.msra.mxu0 %v284
      %605 = vmatpush.msra.mxu0 %v281
      %606 = vmatpush.msra.mxu0 %v278
      %607 = vmatmul.f32.gmra.mxu0 %v544
      %v608 = vpop.f32.mrf.mxu0
      %v609 = vadd.f32 0.0, %v608
      %610 = vmatmul.f32.gmra.mxu0 %v547
      %v611 = vpop.f32.mrf.mxu0
      %v612 = vadd.f32 0.0, %v611
      %613 = vmatmul.f32.gmra.mxu0 %v550
      %v614 = vpop.f32.mrf.mxu0
      %v615 = vadd.f32 0.0, %v614
      %616 = vmatmul.f32.gmra.mxu0 %v553
      %v617 = vpop.f32.mrf.mxu0
      %v618 = vadd.f32 0.0, %v617
      %619 = vmatmul.f32.gmra.mxu0 %v556
      %v620 = vpop.f32.mrf.mxu0
      %v621 = vadd.f32 0.0, %v620
      %622 = vmatmul.f32.gmra.mxu0 %v559
      %v623 = vpop.f32.mrf.mxu0
      %v624 = vadd.f32 0.0, %v623
      %625 = vmatmul.f32.gmra.mxu0 %v562
      %v626 = vpop.f32.mrf.mxu0
      %v627 = vadd.f32 0.0, %v626
      %628 = vmatmul.f32.gmra.mxu0 %v565
      %v629 = vpop.f32.mrf.mxu0
      %v630 = vadd.f32 0.0, %v629
      %631 = vmatmul.f32.gmra.mxu0 %v568
      %v632 = vpop.f32.mrf.mxu0
      %v633 = vadd.f32 0.0, %v632
      %634 = vmatmul.f32.gmra.mxu0 %v571
      %v635 = vpop.f32.mrf.mxu0
      %v636 = vadd.f32 0.0, %v635
      %637 = vmatmul.f32.gmra.mxu0 %v574
      %v638 = vpop.f32.mrf.mxu0
      %v639 = vadd.f32 0.0, %v638
      %640 = vmatmul.f32.gmra.mxu0 %v577
      %v641 = vpop.f32.mrf.mxu0
      %v642 = vadd.f32 0.0, %v641
      %643 = vmatmul.f32.gmra.mxu0 %v580
      %v644 = vpop.f32.mrf.mxu0
      %v645 = vadd.f32 0.0, %v644
      %646 = vmatmul.f32.gmra.mxu0 %v583
      %v647 = vpop.f32.mrf.mxu0
      %v648 = vadd.f32 0.0, %v647
      %649 = vmatmul.f32.gmra.mxu0 %v586
      %v650 = vpop.f32.mrf.mxu0
      %v651 = vadd.f32 0.0, %v650
      %652 = vmatmul.f32.gmra.mxu0 %v589
      %v653 = vpop.f32.mrf.mxu0
      %v654 = vadd.f32 0.0, %v653
      %655 = vdwg.mxu0
      %v656 = vadd.f32 %v480, %v609
      %v657 = vadd.f32 %v483, %v612
      %v658 = vadd.f32 %v486, %v615
      %v659 = vadd.f32 %v489, %v618
      %v660 = vadd.f32 %v492, %v621
      %v661 = vadd.f32 %v495, %v624
      %v662 = vadd.f32 %v498, %v627
      %v663 = vadd.f32 %v501, %v630
      %v664 = vadd.f32 %v504, %v633
      %v665 = vadd.f32 %v507, %v636
      %v666 = vadd.f32 %v510, %v639
      %v667 = vadd.f32 %v513, %v642
      %v668 = vadd.f32 %v516, %v645
      %v669 = vadd.f32 %v519, %v648
      %v670 = vadd.f32 %v522, %v651
      %v671 = vadd.f32 %v525, %v654
      %s672 = scalar_lea.vmem %s3, 128
      %v673 = vld [vmem:[%s672] sm:$0xff]
      %v674 = vld [vmem:[%s672 + $0x8] sm:$0xff]
      %v675 = vld [vmem:[%s672 + $0x10] sm:$0xff]
      %v676 = vld [vmem:[%s672 + $0x18] sm:$0xff]
      %v677 = vld [vmem:[%s672 + $0x20] sm:$0xff]
      %v678 = vld [vmem:[%s672 + $0x28] sm:$0xff]
      %v679 = vld [vmem:[%s672 + $0x30] sm:$0xff]
      %v680 = vld [vmem:[%s672 + $0x38] sm:$0xff]
      %v681 = vld [vmem:[%s672 + $0x40] sm:$0xff]
      %v682 = vld [vmem:[%s672 + $0x48] sm:$0xff]
      %v683 = vld [vmem:[%s672 + $0x50] sm:$0xff]
      %v684 = vld [vmem:[%s672 + $0x58] sm:$0xff]
      %v685 = vld [vmem:[%s672 + $0x60] sm:$0xff]
      %v686 = vld [vmem:[%s672 + $0x68] sm:$0xff]
      %v687 = vld [vmem:[%s672 + $0x70] sm:$0xff]
      %v688 = vld [vmem:[%s672 + $0x78] sm:$0xff]
      %697 = vrot.lane.b32.xlu0 %v278, 112
      %v698 = vpop.permute.xlu0 %697
      %699 = vrot.lane.b32.xlu0 %v281, 112
      %v700 = vpop.permute.xlu0 %699
      %701 = vrot.lane.b32.xlu0 %v284, 112
      %v702 = vpop.permute.xlu0 %701
      %703 = vrot.lane.b32.xlu0 %v287, 112
      %v704 = vpop.permute.xlu0 %703
      %705 = vrot.lane.b32.xlu0 %v290, 112
      %v706 = vpop.permute.xlu0 %705
      %707 = vrot.lane.b32.xlu0 %v293, 112
      %v708 = vpop.permute.xlu0 %707
      %709 = vrot.lane.b32.xlu0 %v296, 112
      %v710 = vpop.permute.xlu0 %709
      %711 = vrot.lane.b32.xlu0 %v299, 112
      %v712 = vpop.permute.xlu0 %711
      %v722 = vsel %vm413, %v673, 0
      %v725 = vsel %vm413, %v674, 0
      %v728 = vsel %vm413, %v675, 0
      %v731 = vsel %vm413, %v676, 0
      %v734 = vsel %vm413, %v677, 0
      %v737 = vsel %vm413, %v678, 0
      %v740 = vsel %vm413, %v679, 0
      %v743 = vsel %vm413, %v680, 0
      %v746 = vsel %vm413, %v681, 0
      %v749 = vsel %vm413, %v682, 0
      %v752 = vsel %vm413, %v683, 0
      %v755 = vsel %vm413, %v684, 0
      %v758 = vsel %vm413, %v685, 0
      %v761 = vsel %vm413, %v686, 0
      %v764 = vsel %vm413, %v687, 0
      %v767 = vsel %vm413, %v688, 0
      %769 = vmatpush.msra.mxu0 0.0
      %770 = vmatpush.msra.mxu0 0.0
      %771 = vmatpush.msra.mxu0 0.0
      %772 = vmatpush.msra.mxu0 0.0
      %773 = vmatpush.msra.mxu0 0.0
      %774 = vmatpush.msra.mxu0 0.0
      %775 = vmatpush.msra.mxu0 0.0
      %776 = vmatpush.msra.mxu0 0.0
      %777 = vmatpush.msra.mxu0 %v712
      %778 = vmatpush.msra.mxu0 %v710
      %779 = vmatpush.msra.mxu0 %v708
      %780 = vmatpush.msra.mxu0 %v706
      %781 = vmatpush.msra.mxu0 %v704
      %782 = vmatpush.msra.mxu0 %v702
      %783 = vmatpush.msra.mxu0 %v700
      %784 = vmatpush.msra.mxu0 %v698
      %785 = vmatmul.f32.gmra.mxu0 %v722
      %v786 = vpop.f32.mrf.mxu0
      %v787 = vadd.f32 0.0, %v786
      %788 = vmatmul.f32.gmra.mxu0 %v725
      %v789 = vpop.f32.mrf.mxu0
      %v790 = vadd.f32 0.0, %v789
      %791 = vmatmul.f32.gmra.mxu0 %v728
      %v792 = vpop.f32.mrf.mxu0
      %v793 = vadd.f32 0.0, %v792
      %794 = vmatmul.f32.gmra.mxu0 %v731
      %v795 = vpop.f32.mrf.mxu0
      %v796 = vadd.f32 0.0, %v795
      %797 = vmatmul.f32.gmra.mxu0 %v734
      %v798 = vpop.f32.mrf.mxu0
      %v799 = vadd.f32 0.0, %v798
      %800 = vmatmul.f32.gmra.mxu0 %v737
      %v801 = vpop.f32.mrf.mxu0
      %v802 = vadd.f32 0.0, %v801
      %803 = vmatmul.f32.gmra.mxu0 %v740
      %v804 = vpop.f32.mrf.mxu0
      %v805 = vadd.f32 0.0, %v804
      %806 = vmatmul.f32.gmra.mxu0 %v743
      %v807 = vpop.f32.mrf.mxu0
      %v808 = vadd.f32 0.0, %v807
      %809 = vmatmul.f32.gmra.mxu0 %v746
      %v810 = vpop.f32.mrf.mxu0
      %v811 = vadd.f32 0.0, %v810
      %812 = vmatmul.f32.gmra.mxu0 %v749
      %v813 = vpop.f32.mrf.mxu0
      %v814 = vadd.f32 0.0, %v813
      %815 = vmatmul.f32.gmra.mxu0 %v752
      %v816 = vpop.f32.mrf.mxu0
      %v817 = vadd.f32 0.0, %v816
      %818 = vmatmul.f32.gmra.mxu0 %v755
      %v819 = vpop.f32.mrf.mxu0
      %v820 = vadd.f32 0.0, %v819
      %821 = vmatmul.f32.gmra.mxu0 %v758
      %v822 = vpop.f32.mrf.mxu0
      %v823 = vadd.f32 0.0, %v822
      %824 = vmatmul.f32.gmra.mxu0 %v761
      %v825 = vpop.f32.mrf.mxu0
      %v826 = vadd.f32 0.0, %v825
      %827 = vmatmul.f32.gmra.mxu0 %v764
      %v828 = vpop.f32.mrf.mxu0
      %v829 = vadd.f32 0.0, %v828
      %830 = vmatmul.f32.gmra.mxu0 %v767
      %v831 = vpop.f32.mrf.mxu0
      %v832 = vadd.f32 0.0, %v831
      %833 = vdwg.mxu0
      %v834 = vadd.f32 %v656, %v787
      %v835 = vadd.f32 %v657, %v790
      %v836 = vadd.f32 %v658, %v793
      %v837 = vadd.f32 %v659, %v796
      %v838 = vadd.f32 %v660, %v799
      %v839 = vadd.f32 %v661, %v802
      %v840 = vadd.f32 %v662, %v805
      %v841 = vadd.f32 %v663, %v808
      %v842 = vadd.f32 %v664, %v811
      %v843 = vadd.f32 %v665, %v814
      %v844 = vadd.f32 %v666, %v817
      %v845 = vadd.f32 %v667, %v820
      %v846 = vadd.f32 %v668, %v823
      %v847 = vadd.f32 %v669, %v826
      %v848 = vadd.f32 %v670, %v829
      %v849 = vadd.f32 %v671, %v832
      %s850 = scalar_lea.vmem %s3, 256
      %v851 = vld [vmem:[%s850] sm:$0xff]
      %v852 = vld [vmem:[%s850 + $0x8] sm:$0xff]
      %v853 = vld [vmem:[%s850 + $0x10] sm:$0xff]
      %v854 = vld [vmem:[%s850 + $0x18] sm:$0xff]
      %v855 = vld [vmem:[%s850 + $0x20] sm:$0xff]
      %v856 = vld [vmem:[%s850 + $0x28] sm:$0xff]
      %v857 = vld [vmem:[%s850 + $0x30] sm:$0xff]
      %v858 = vld [vmem:[%s850 + $0x38] sm:$0xff]
      %v859 = vld [vmem:[%s850 + $0x40] sm:$0xff]
      %v860 = vld [vmem:[%s850 + $0x48] sm:$0xff]
      %v861 = vld [vmem:[%s850 + $0x50] sm:$0xff]
      %v862 = vld [vmem:[%s850 + $0x58] sm:$0xff]
      %v863 = vld [vmem:[%s850 + $0x60] sm:$0xff]
      %v864 = vld [vmem:[%s850 + $0x68] sm:$0xff]
      %v865 = vld [vmem:[%s850 + $0x70] sm:$0xff]
      %v866 = vld [vmem:[%s850 + $0x78] sm:$0xff]
      %867 = vrot.lane.b32.xlu0 %v278, 96
      %v868 = vpop.permute.xlu0 %867
      %869 = vrot.lane.b32.xlu0 %v281, 96
      %v870 = vpop.permute.xlu0 %869
      %871 = vrot.lane.b32.xlu0 %v284, 96
      %v872 = vpop.permute.xlu0 %871
      %873 = vrot.lane.b32.xlu0 %v287, 96
      %v874 = vpop.permute.xlu0 %873
      %875 = vrot.lane.b32.xlu0 %v290, 96
      %v876 = vpop.permute.xlu0 %875
      %877 = vrot.lane.b32.xlu0 %v293, 96
      %v878 = vpop.permute.xlu0 %877
      %879 = vrot.lane.b32.xlu0 %v296, 96
      %v880 = vpop.permute.xlu0 %879
      %881 = vrot.lane.b32.xlu0 %v299, 96
      %v882 = vpop.permute.xlu0 %881
      %v892 = vsel %vm413, %v851, 0
      %v895 = vsel %vm413, %v852, 0
      %v898 = vsel %vm413, %v853, 0
      %v901 = vsel %vm413, %v854, 0
      %v904 = vsel %vm413, %v855, 0
      %v907 = vsel %vm413, %v856, 0
      %v910 = vsel %vm413, %v857, 0
      %v913 = vsel %vm413, %v858, 0
      %v916 = vsel %vm413, %v859, 0
      %v919 = vsel %vm413, %v860, 0
      %v922 = vsel %vm413, %v861, 0
      %v925 = vsel %vm413, %v862, 0
      %v928 = vsel %vm413, %v863, 0
      %v931 = vsel %vm413, %v864, 0
      %v934 = vsel %vm413, %v865, 0
      %v937 = vsel %vm413, %v866, 0
      %939 = vmatpush.msra.mxu0 0.0
      %940 = vmatpush.msra.mxu0 0.0
      %941 = vmatpush.msra.mxu0 0.0
      %942 = vmatpush.msra.mxu0 0.0
      %943 = vmatpush.msra.mxu0 0.0
      %944 = vmatpush.msra.mxu0 0.0
      %945 = vmatpush.msra.mxu0 0.0
      %946 = vmatpush.msra.mxu0 0.0
      %947 = vmatpush.msra.mxu0 %v882
      %948 = vmatpush.msra.mxu0 %v880
      %949 = vmatpush.msra.mxu0 %v878
      %950 = vmatpush.msra.mxu0 %v876
      %951 = vmatpush.msra.mxu0 %v874
      %952 = vmatpush.msra.mxu0 %v872
      %953 = vmatpush.msra.mxu0 %v870
      %954 = vmatpush.msra.mxu0 %v868
      %955 = vmatmul.f32.gmra.mxu0 %v892
      %v956 = vpop.f32.mrf.mxu0
      %v957 = vadd.f32 0.0, %v956
      %958 = vmatmul.f32.gmra.mxu0 %v895
      %v959 = vpop.f32.mrf.mxu0
      %v960 = vadd.f32 0.0, %v959
      %961 = vmatmul.f32.gmra.mxu0 %v898
      %v962 = vpop.f32.mrf.mxu0
      %v963 = vadd.f32 0.0, %v962
      %964 = vmatmul.f32.gmra.mxu0 %v901
      %v965 = vpop.f32.mrf.mxu0
      %v966 = vadd.f32 0.0, %v965
      %967 = vmatmul.f32.gmra.mxu0 %v904
      %v968 = vpop.f32.mrf.mxu0
      %v969 = vadd.f32 0.0, %v968
      %970 = vmatmul.f32.gmra.mxu0 %v907
      %v971 = vpop.f32.mrf.mxu0
      %v972 = vadd.f32 0.0, %v971
      %973 = vmatmul.f32.gmra.mxu0 %v910
      %v974 = vpop.f32.mrf.mxu0
      %v975 = vadd.f32 0.0, %v974
      %976 = vmatmul.f32.gmra.mxu0 %v913
      %v977 = vpop.f32.mrf.mxu0
      %v978 = vadd.f32 0.0, %v977
      %979 = vmatmul.f32.gmra.mxu0 %v916
      %v980 = vpop.f32.mrf.mxu0
      %v981 = vadd.f32 0.0, %v980
      %982 = vmatmul.f32.gmra.mxu0 %v919
      %v983 = vpop.f32.mrf.mxu0
      %v984 = vadd.f32 0.0, %v983
      %985 = vmatmul.f32.gmra.mxu0 %v922
      %v986 = vpop.f32.mrf.mxu0
      %v987 = vadd.f32 0.0, %v986
      %988 = vmatmul.f32.gmra.mxu0 %v925
      %v989 = vpop.f32.mrf.mxu0
      %v990 = vadd.f32 0.0, %v989
      %991 = vmatmul.f32.gmra.mxu0 %v928
      %v992 = vpop.f32.mrf.mxu0
      %v993 = vadd.f32 0.0, %v992
      %994 = vmatmul.f32.gmra.mxu0 %v931
      %v995 = vpop.f32.mrf.mxu0
      %v996 = vadd.f32 0.0, %v995
      %997 = vmatmul.f32.gmra.mxu0 %v934
      %v998 = vpop.f32.mrf.mxu0
      %v999 = vadd.f32 0.0, %v998
      %1000 = vmatmul.f32.gmra.mxu0 %v937
      %v1001 = vpop.f32.mrf.mxu0
      %v1002 = vadd.f32 0.0, %v1001
      %1003 = vdwg.mxu0
      %v1004 = vadd.f32 %v834, %v957
      %v1005 = vadd.f32 %v835, %v960
      %v1006 = vadd.f32 %v836, %v963
      %v1007 = vadd.f32 %v837, %v966
      %v1008 = vadd.f32 %v838, %v969
      %v1009 = vadd.f32 %v839, %v972
      %v1010 = vadd.f32 %v840, %v975
      %v1011 = vadd.f32 %v841, %v978
      %v1012 = vadd.f32 %v842, %v981
      %v1013 = vadd.f32 %v843, %v984
      %v1014 = vadd.f32 %v844, %v987
      %v1015 = vadd.f32 %v845, %v990
      %v1016 = vadd.f32 %v846, %v993
      %v1017 = vadd.f32 %v847, %v996
      %v1018 = vadd.f32 %v848, %v999
      %v1019 = vadd.f32 %v849, %v1002
      %s1020 = scalar_lea.vmem %s3, 384
      %v1021 = vld [vmem:[%s1020] sm:$0xff]
      %v1022 = vld [vmem:[%s1020 + $0x8] sm:$0xff]
      %v1023 = vld [vmem:[%s1020 + $0x10] sm:$0xff]
      %v1024 = vld [vmem:[%s1020 + $0x18] sm:$0xff]
      %v1025 = vld [vmem:[%s1020 + $0x20] sm:$0xff]
      %v1026 = vld [vmem:[%s1020 + $0x28] sm:$0xff]
      %v1027 = vld [vmem:[%s1020 + $0x30] sm:$0xff]
      %v1028 = vld [vmem:[%s1020 + $0x38] sm:$0xff]
      %v1029 = vld [vmem:[%s1020 + $0x40] sm:$0xff]
      %v1030 = vld [vmem:[%s1020 + $0x48] sm:$0xff]
      %v1031 = vld [vmem:[%s1020 + $0x50] sm:$0xff]
      %v1032 = vld [vmem:[%s1020 + $0x58] sm:$0xff]
      %v1033 = vld [vmem:[%s1020 + $0x60] sm:$0xff]
      %v1034 = vld [vmem:[%s1020 + $0x68] sm:$0xff]
      %v1035 = vld [vmem:[%s1020 + $0x70] sm:$0xff]
      %v1036 = vld [vmem:[%s1020 + $0x78] sm:$0xff]
      %1037 = vrot.lane.b32.xlu0 %v278, 80
      %v1038 = vpop.permute.xlu0 %1037
      %1039 = vrot.lane.b32.xlu0 %v281, 80
      %v1040 = vpop.permute.xlu0 %1039
      %1041 = vrot.lane.b32.xlu0 %v284, 80
      %v1042 = vpop.permute.xlu0 %1041
      %1043 = vrot.lane.b32.xlu0 %v287, 80
      %v1044 = vpop.permute.xlu0 %1043
      %1045 = vrot.lane.b32.xlu0 %v290, 80
      %v1046 = vpop.permute.xlu0 %1045
      %1047 = vrot.lane.b32.xlu0 %v293, 80
      %v1048 = vpop.permute.xlu0 %1047
      %1049 = vrot.lane.b32.xlu0 %v296, 80
      %v1050 = vpop.permute.xlu0 %1049
      %1051 = vrot.lane.b32.xlu0 %v299, 80
      %v1052 = vpop.permute.xlu0 %1051
      %v1062 = vsel %vm413, %v1021, 0
      %v1065 = vsel %vm413, %v1022, 0
      %v1068 = vsel %vm413, %v1023, 0
      %v1071 = vsel %vm413, %v1024, 0
      %v1074 = vsel %vm413, %v1025, 0
      %v1077 = vsel %vm413, %v1026, 0
      %v1080 = vsel %vm413, %v1027, 0
      %v1083 = vsel %vm413, %v1028, 0
      %v1086 = vsel %vm413, %v1029, 0
      %v1089 = vsel %vm413, %v1030, 0
      %v1092 = vsel %vm413, %v1031, 0
      %v1095 = vsel %vm413, %v1032, 0
      %v1098 = vsel %vm413, %v1033, 0
      %v1101 = vsel %vm413, %v1034, 0
      %v1104 = vsel %vm413, %v1035, 0
      %v1107 = vsel %vm413, %v1036, 0
      %1109 = vmatpush.msra.mxu0 0.0
      %1110 = vmatpush.msra.mxu0 0.0
      %1111 = vmatpush.msra.mxu0 0.0
      %1112 = vmatpush.msra.mxu0 0.0
      %1113 = vmatpush.msra.mxu0 0.0
      %1114 = vmatpush.msra.mxu0 0.0
      %1115 = vmatpush.msra.mxu0 0.0
      %1116 = vmatpush.msra.mxu0 0.0
      %1117 = vmatpush.msra.mxu0 %v1052
      %1118 = vmatpush.msra.mxu0 %v1050
      %1119 = vmatpush.msra.mxu0 %v1048
      %1120 = vmatpush.msra.mxu0 %v1046
      %1121 = vmatpush.msra.mxu0 %v1044
      %1122 = vmatpush.msra.mxu0 %v1042
      %1123 = vmatpush.msra.mxu0 %v1040
      %1124 = vmatpush.msra.mxu0 %v1038
      %1125 = vmatmul.f32.gmra.mxu0 %v1062
      %v1126 = vpop.f32.mrf.mxu0
      %v1127 = vadd.f32 0.0, %v1126
      %1128 = vmatmul.f32.gmra.mxu0 %v1065
      %v1129 = vpop.f32.mrf.mxu0
      %v1130 = vadd.f32 0.0, %v1129
      %1131 = vmatmul.f32.gmra.mxu0 %v1068
      %v1132 = vpop.f32.mrf.mxu0
      %v1133 = vadd.f32 0.0, %v1132
      %1134 = vmatmul.f32.gmra.mxu0 %v1071
      %v1135 = vpop.f32.mrf.mxu0
      %v1136 = vadd.f32 0.0, %v1135
      %1137 = vmatmul.f32.gmra.mxu0 %v1074
      %v1138 = vpop.f32.mrf.mxu0
      %v1139 = vadd.f32 0.0, %v1138
      %1140 = vmatmul.f32.gmra.mxu0 %v1077
      %v1141 = vpop.f32.mrf.mxu0
      %v1142 = vadd.f32 0.0, %v1141
      %1143 = vmatmul.f32.gmra.mxu0 %v1080
      %v1144 = vpop.f32.mrf.mxu0
      %v1145 = vadd.f32 0.0, %v1144
      %1146 = vmatmul.f32.gmra.mxu0 %v1083
      %v1147 = vpop.f32.mrf.mxu0
      %v1148 = vadd.f32 0.0, %v1147
      %1149 = vmatmul.f32.gmra.mxu0 %v1086
      %v1150 = vpop.f32.mrf.mxu0
      %v1151 = vadd.f32 0.0, %v1150
      %1152 = vmatmul.f32.gmra.mxu0 %v1089
      %v1153 = vpop.f32.mrf.mxu0
      %v1154 = vadd.f32 0.0, %v1153
      %1155 = vmatmul.f32.gmra.mxu0 %v1092
      %v1156 = vpop.f32.mrf.mxu0
      %v1157 = vadd.f32 0.0, %v1156
      %1158 = vmatmul.f32.gmra.mxu0 %v1095
      %v1159 = vpop.f32.mrf.mxu0
      %v1160 = vadd.f32 0.0, %v1159
      %1161 = vmatmul.f32.gmra.mxu0 %v1098
      %v1162 = vpop.f32.mrf.mxu0
      %v1163 = vadd.f32 0.0, %v1162
      %1164 = vmatmul.f32.gmra.mxu0 %v1101
      %v1165 = vpop.f32.mrf.mxu0
      %v1166 = vadd.f32 0.0, %v1165
      %1167 = vmatmul.f32.gmra.mxu0 %v1104
      %v1168 = vpop.f32.mrf.mxu0
      %v1169 = vadd.f32 0.0, %v1168
      %1170 = vmatmul.f32.gmra.mxu0 %v1107
      %v1171 = vpop.f32.mrf.mxu0
      %v1172 = vadd.f32 0.0, %v1171
      %1173 = vdwg.mxu0
      %v1174 = vadd.f32 %v1004, %v1127
      %v1175 = vadd.f32 %v1005, %v1130
      %v1176 = vadd.f32 %v1006, %v1133
      %v1177 = vadd.f32 %v1007, %v1136
      %v1178 = vadd.f32 %v1008, %v1139
      %v1179 = vadd.f32 %v1009, %v1142
      %v1180 = vadd.f32 %v1010, %v1145
      %v1181 = vadd.f32 %v1011, %v1148
      %v1182 = vadd.f32 %v1012, %v1151
      %v1183 = vadd.f32 %v1013, %v1154
      %v1184 = vadd.f32 %v1014, %v1157
      %v1185 = vadd.f32 %v1015, %v1160
      %v1186 = vadd.f32 %v1016, %v1163
      %v1187 = vadd.f32 %v1017, %v1166
      %v1188 = vadd.f32 %v1018, %v1169
      %v1189 = vadd.f32 %v1019, %v1172
      %1190 = vst.msk [vmem:[%s224] sm:$0xff] %vm235, %v1174
      %1191 = vst.msk [vmem:[%s224 + $0x8] sm:$0xff] %vm235, %v1175
      %1192 = vst.msk [vmem:[%s224 + $0x10] sm:$0xff] %vm235, %v1176
      %1193 = vst.msk [vmem:[%s224 + $0x18] sm:$0xff] %vm235, %v1177
      %1194 = vst.msk [vmem:[%s224 + $0x20] sm:$0xff] %vm235, %v1178
      %1195 = vst.msk [vmem:[%s224 + $0x28] sm:$0xff] %vm235, %v1179
      %1196 = vst.msk [vmem:[%s224 + $0x30] sm:$0xff] %vm235, %v1180
      %1197 = vst.msk [vmem:[%s224 + $0x38] sm:$0xff] %vm235, %v1181
      %1198 = vst.msk [vmem:[%s224 + $0x40] sm:$0xff] %vm235, %v1182
      %1199 = vst.msk [vmem:[%s224 + $0x48] sm:$0xff] %vm235, %v1183
      %1200 = vst.msk [vmem:[%s224 + $0x50] sm:$0xff] %vm235, %v1184
      %1201 = vst.msk [vmem:[%s224 + $0x58] sm:$0xff] %vm235, %v1185
      %1202 = vst.msk [vmem:[%s224 + $0x60] sm:$0xff] %vm235, %v1186
      %1203 = vst.msk [vmem:[%s224 + $0x68] sm:$0xff] %vm235, %v1187
      %1204 = vst.msk [vmem:[%s224 + $0x70] sm:$0xff] %vm235, %v1188
      %1205 = vst.msk [vmem:[%s224 + $0x78] sm:$0xff] %vm235, %v1189
      %p1206 = scmp.lt.s32.totalorder %s16, 1
      %s1207 = scalar_select %p1206, %s16, 1
      %s1208 = smul.addr %s1207, 16
      %s1209 = smul.addr %s1208, 8
      %s1210 = scalar_lea.vmem %s5, %s1209
      // Predicated region
      $region41: #{tpu_custom_call.1} parent=39 // pred_check
        %p1211 = pneg %p144
      $region42: #{tpu_custom_call.1} parent=39 // pred_check_branch
        %1213 = sbr.rel (%p1211) target = $region44
      $region43: #{tpu_custom_call.1} parent=39 // pred_region
        _
      $region44: #{tpu_custom_call.1} parent=39 // pred_fallthru
        _
    $region40: #{tpu_custom_call.1} parent=5 // pred_fallthru
      _
    %p1214 = scmp.le.s32.totalorder 2, %s11
    // Predicated region
    $region45: #{tpu_custom_call.1} parent=5 // pred_check
      %p1215 = pneg %p1214
    $region46: #{tpu_custom_call.1} parent=5 // pred_check_branch
      %1217 = sbr.rel (%p1215) target = $region48
    $region47: #{tpu_custom_call.1} parent=5 // pred_region
      %s1218 = ssub.s32 %s11, 2
      // Predicated region
      $region49: #{tpu_custom_call.1} parent=47 // pred_check
        %p1219 = pneg %p150
      $region50: #{tpu_custom_call.1} parent=47 // pred_check_branch
        %1221 = sbr.rel (%p1219) target = $region52
      $region51: #{tpu_custom_call.1} parent=47 // pred_region
        %p1222 = scmp.lt.s32.totalorder %s17, 1
        %s1223 = scalar_select %p1222, %s17, 1
        %s1224 = smul.addr %s1223, 16
        %s1225 = smul.addr %s1224, 8
        %s1226 = scalar_lea.vmem %s5, %s1225
      $region52: #{tpu_custom_call.1} parent=47 // pred_fallthru
        _
    $region48: #{tpu_custom_call.1} parent=5 // pred_fallthru
      _
  $region6: #{tpu_custom_call.1} parent=0 // loop_footer
    %s15 = sadd.s32 1, %s11
  $region7: #{tpu_custom_call.1} parent=0 // loop_footer_branch
    %10 = sbr.rel target = $region3
  $region8: #{tpu_custom_call.1} parent=0 // loop_exit
    _

</llo_original>
